<compile_context>
chip_gen: v6e
topology: v6e:2x2x1
jax: 0.10.0
libtpu: 0.0.40
codegen_flags: <defaults>
</compile_context>

<pallas_src>
import functools

import jax
import jax.numpy as jnp
from jax import lax
from jax.experimental import pallas as pl
from jax.experimental.pallas import tpu as pltpu

_MIB = 1024 * 1024


def _vmem_capacity_bytes(default=64 * _MIB):
    """Physical VMEM per core; conservative (v7x-sized) fallback if unknown."""
    try:
        cap = getattr(pltpu.get_tpu_info(), "vmem_capacity_bytes", None)
        if cap:
            return int(cap)
    except Exception:
        pass
    return default


def _round_down(x, m):
    return max(m, (x // m) * m)


def _choose_tiling(B, C, pred_itemsize):
    """VMEM-budget-derived row tile + optional 2-way megacore split."""
    c_pad = ((C + 127) // 128) * 128
    # Per-row VMEM bytes:
    #   2 pipeline buffers x (lane-padded pred row + 128-lane-padded i32 target)
    #   + ~4 live f32/i32 lane-padded intermediates (upcast pred, lane iota,
    #     one-hot mask, select result) for the in-kernel compute.
    buffered_row = 2 * (c_pad * pred_itemsize + 128 * 4)
    compute_row = 4 * c_pad * 4
    row_bytes = buffered_row + compute_row

    cap = _vmem_capacity_bytes()
    budget = min(cap // 2, 48 * _MIB)      # ~32 MiB on v7x (64 MiB part), 48 MiB on v5e/v6e
    max_rows = max(16, budget // row_bytes)

    if B <= max_rows:
        tile_b = B                          # single full-extent block
    else:
        tile_b = _round_down(min(max_rows, B), 16)   # bf16 sublane tile = 16 rows

    n_row_tiles = pl.cdiv(B, tile_b)
    n_splits = 2 if n_row_tiles >= 2 else 1          # use both v7x TensorCores
    tiles_per_split = pl.cdiv(n_row_tiles, n_splits)
    vmem_limit = int(min(cap, budget + 16 * _MIB))
    return tile_b, n_row_tiles, n_splits, tiles_per_split, vmem_limit


def _nll_loss_kernel(pred_ref, target_ref, out_ref, *,
                     n_rows, tile_b, tiles_per_split, need_mask):
    """Accumulate -(1/B) * sum_i pred[i, target[i]] per split into out_ref."""
    c = pl.program_id(0)   # megacore split      ("parallel")
    i = pl.program_id(1)   # row tile in split   ("arbitrary" reduction)

    @pl.when(i == 0)
    def _init():
        out_ref[...] = jnp.zeros_like(out_ref)

    # In-kernel upcast (VPU): pred may arrive as bf16; no wrapper-side cast pass.
    pred = pred_ref[...].astype(jnp.float32)             # (tile_b, C)
    tgt = target_ref[...]                                 # (tile_b, 1) int32
    tb, n_cls = pred.shape

    # One-hot selection of pred[r, target[r]] via lane iota (VPU/XLU only; no
    # MXU, no per-row dynamic gather).
    col_ids = lax.broadcasted_iota(jnp.int32, (tb, n_cls), 1)
    sel = col_ids == tgt                                   # (tile_b, C) bool

    if need_mask:
        # Rows past n_rows (partial last tile / grid over-coverage) contribute 0.
        row_start = (c * tiles_per_split + i) * tile_b
        row_ids = lax.broadcasted_iota(jnp.int32, (tb, 1), 0) + row_start
        sel = jnp.logical_and(sel, row_ids < n_rows)

    # where(...) rather than pred*mask: avoids -inf*0 NaNs from -inf log-probs.
    picked = jnp.where(sel, pred, jnp.zeros_like(pred))
    out_ref[...] += jnp.sum(picked)

    @pl.when(i == pl.num_programs(1) - 1)
    def _finalize():
        # Trace-time constant -1/B; per-split partials are already scaled, so
        # the caller's sum over splits is directly the mean NLL.
        out_ref[...] = out_ref[...] * jnp.float32(-1.0 / n_rows)


def nll_loss_pallas(pred, target):
    """F.nll_loss(pred, target) with default 'mean' reduction, on TPU via Pallas."""
    B, C = pred.shape
    pred_itemsize = pred.dtype.itemsize
    tile_b, n_row_tiles, n_splits, tiles_per_split, vmem_limit = _choose_tiling(
        B, C, pred_itemsize)

    covered_rows = n_splits * tiles_per_split * tile_b
    need_mask = covered_rows != B   # elide mask at trace time on exact coverage

    target_col = target.astype(jnp.int32).reshape(B, 1)

    # Clamp the row-block index so over-coverage tiles never go out of range;
    # their (duplicated) rows are zeroed by the in-kernel validity mask.
    def row_block_index(c, i):
        return (jnp.minimum(c * tiles_per_split + i, n_row_tiles - 1), 0)

    kernel = functools.partial(
        _nll_loss_kernel, n_rows=B, tile_b=tile_b,
        tiles_per_split=tiles_per_split, need_mask=need_mask)

    cost = pl.CostEstimate(
        flops=2 * B * C,
        transcendentals=0,
        bytes_accessed=int(B * C * pred_itemsize + 4 * B + n_splits * 8 * 128 * 4))

    partials = pl.pallas_call(
        kernel,
        out_shape=jax.ShapeDtypeStruct((n_splits, 8, 128), jnp.float32),
        grid=(n_splits, tiles_per_split),
        in_specs=[
            pl.BlockSpec((tile_b, C), row_block_index),   # pred row tile
            pl.BlockSpec((tile_b, 1), row_block_index),   # target row tile
        ],
        # One lane-dense (1, 8, 128) accumulator block per split, VMEM-resident
        # across the "arbitrary" axis; every element carries the same partial.
        out_specs=pl.BlockSpec((1, 8, 128), lambda c, i: (c, 0, 0)),
        compiler_params=pltpu.CompilerParams(
            dimension_semantics=("parallel", "arbitrary"),
            vmem_limit_bytes=vmem_limit),
        cost_estimate=cost,
    )(pred, target_col)

    # Sum of per-split partials (each already scaled by -1/B) == mean NLL.
    return jnp.sum(partials[:, 0, 0])


class GetLoss:
    """JAX/Pallas equivalent of pointnet2_ssg.get_loss (no parameters)."""

    def __call__(self, pred, target, trans_feat=None):
        # trans_feat is accepted but unused, matching the PyTorch module.
        return nll_loss_pallas(pred, target)


if __name__ == "__main__":
    key = jax.random.PRNGKey(0)
    k1, k2, k3, k4, k5 = jax.random.split(key, 5)

    loss_fn = GetLoss()

    # --- Case 1: classification-scale call (matches PointNet++ cls usage) ---
    B, C = 8, 16
    logits = jax.random.normal(k1, (B, C), dtype=jnp.float32)
    pred = jax.nn.log_softmax(logits, axis=-1)
    target = jax.random.randint(k2, (B,), 0, C, dtype=jnp.int32)
    trans_feat = jax.random.normal(k3, (B, 64, 32), dtype=jnp.float32)  # unused

    loss = jax.block_until_ready(loss_fn(pred, target, trans_feat))
    ref = -jnp.mean(pred[jnp.arange(B), target])
    assert jnp.allclose(loss, ref, atol=1e-6, rtol=1e-6), (loss, ref)

    # --- Case 2: per-point-scale call (exercises budgeted tiling, the 2-way
    #     parallel split, block-index clamping and the row-validity mask) ---
    B2, C2 = 20000, 40
    logits2 = jax.random.normal(k4, (B2, C2), dtype=jnp.float32)
    pred2 = jax.nn.log_softmax(logits2, axis=-1)
    target2 = jax.random.randint(k5, (B2,), 0, C2, dtype=jnp.int32)

    loss2 = jax.block_until_ready(loss_fn(pred2, target2, None))
    ref2 = -jnp.mean(pred2[jnp.arange(B2), target2])
    assert jnp.allclose(loss2, ref2, atol=1e-4, rtol=1e-5), (loss2, ref2)

    print("KERNEL_OK")
</pallas_src>

<mosaic_0001>
module attributes {stable_mosaic.version = 11 : i64} {
  func.func @_nll_loss_kernel(%arg0: i32, %arg1: i32, %arg2: memref<8x16xf32, #tpu.memory_space<vmem>>, %arg3: memref<8x1xi32, #tpu.memory_space<vmem>>, %arg4: memref<1x8x128xf32, #tpu.memory_space<vmem>>) attributes {dimension_semantics = [#tpu.dimension_semantics<parallel>, #tpu.dimension_semantics<arbitrary>], iteration_bounds = array<i64: 1, 1>, scalar_prefetch = 0 : i64, scratch_operands = 0 : i64, tpu.core_type = #tpu.core_type<tc>, window_params = [{transform_indices = @transform_0, window_bounds = array<i64: 8, 16>}, {transform_indices = @transform_1, window_bounds = array<i64: 8, 1>}, {transform_indices = @transform_2, window_bounds = array<i64: 1, 8, 128>}]} {
    %c0_i32 = arith.constant 0 : i32
    %0 = arith.cmpi eq, %arg1, %c0_i32 : i32
    %1 = arith.extui %0 : i1 to i32
    %c0_i32_0 = arith.constant 0 : i32
    %2 = arith.cmpi ne, %1, %c0_i32_0 : i32
    scf.if %2 {
      %cst_13 = arith.constant 0.000000e+00 : f32
      %21 = vector.broadcast %cst_13 : f32 to vector<1x8x128xf32>
      %c0_14 = arith.constant 0 : index
      %c0_15 = arith.constant 0 : index
      %c0_16 = arith.constant 0 : index
      %22 = vector.load %arg4[%c0_14, %c0_15, %c0_16] : memref<1x8x128xf32, #tpu.memory_space<vmem>>, vector<1x8x128xf32>
      tpu.vector_store %arg4[%c0_14, %c0_15, %c0_16], %21 {strides = array<i32>} : memref<1x8x128xf32, #tpu.memory_space<vmem>>, vector<1x8x128xf32>,
    } else {
    }
    %c0 = arith.constant 0 : index
    %c0_1 = arith.constant 0 : index
    %3 = vector.load %arg2[%c0, %c0_1] : memref<8x16xf32, #tpu.memory_space<vmem>>, vector<8x16xf32>
    %c0_2 = arith.constant 0 : index
    %c0_3 = arith.constant 0 : index
    %4 = vector.load %arg3[%c0_2, %c0_3] : memref<8x1xi32, #tpu.memory_space<vmem>>, vector<8x1xi32>
    %5 = tpu.iota {dimensions = array<i32: 1>} : vector<8x16xi32>
    %6 = vector.broadcast %4 : vector<8x1xi32> to vector<8x16xi32>
    %7 = arith.cmpi eq, %5, %6 : vector<8x16xi32>
    %cst = arith.constant 0.000000e+00 : f32
    %8 = vector.broadcast %cst : f32 to vector<8x16xf32>
    %9 = arith.select %7, %3, %8 : vector<8x16xi1>, vector<8x16xf32>
    %c0_4 = arith.constant 0 : index
    %c0_5 = arith.constant 0 : index
    %c0_6 = arith.constant 0 : index
    %10 = vector.load %arg4[%c0_4, %c0_5, %c0_6] : memref<1x8x128xf32, #tpu.memory_space<vmem>>, vector<1x8x128xf32>
    %11 = vector.shape_cast %9 : vector<8x16xf32> to vector<1x8x16xf32>
    %cst_7 = arith.constant dense<0.000000e+00> : vector<1xf32>
    %12 = vector.multi_reduction <add>, %11, %cst_7 [1, 2] : vector<1x8x16xf32> to vector<1xf32>
    %13 = vector.shape_cast %12 : vector<1xf32> to vector<1x1x1xf32>
    %14 = vector.extract %13[0, 0, 0] : f32 from vector<1x1x1xf32>
    %15 = vector.broadcast %14 : f32 to vector<1x8x128xf32>
    %16 = arith.addf %10, %15 : vector<1x8x128xf32>
    %c0_8 = arith.constant 0 : index
    %c0_9 = arith.constant 0 : index
    %c0_10 = arith.constant 0 : index
    %17 = vector.load %arg4[%c0_8, %c0_9, %c0_10] : memref<1x8x128xf32, #tpu.memory_space<vmem>>, vector<1x8x128xf32>
    tpu.vector_store %arg4[%c0_8, %c0_9, %c0_10], %16 {strides = array<i32>} : memref<1x8x128xf32, #tpu.memory_space<vmem>>, vector<1x8x128xf32>,
    %c0_i32_11 = arith.constant 0 : i32
    %18 = arith.cmpi eq, %arg1, %c0_i32_11 : i32
    %19 = arith.extui %18 : i1 to i32
    %c0_i32_12 = arith.constant 0 : i32
    %20 = arith.cmpi ne, %19, %c0_i32_12 : i32
    scf.if %20 {
      %c0_13 = arith.constant 0 : index
      %c0_14 = arith.constant 0 : index
      %c0_15 = arith.constant 0 : index
      %21 = vector.load %arg4[%c0_13, %c0_14, %c0_15] : memref<1x8x128xf32, #tpu.memory_space<vmem>>, vector<1x8x128xf32>
      %cst_16 = arith.constant -1.250000e-01 : f32
      %22 = vector.broadcast %cst_16 : f32 to vector<1x8x128xf32>
      %23 = arith.mulf %21, %22 : vector<1x8x128xf32>
      %c0_17 = arith.constant 0 : index
      %c0_18 = arith.constant 0 : index
      %c0_19 = arith.constant 0 : index
      %24 = vector.load %arg4[%c0_17, %c0_18, %c0_19] : memref<1x8x128xf32, #tpu.memory_space<vmem>>, vector<1x8x128xf32>
      tpu.vector_store %arg4[%c0_17, %c0_18, %c0_19], %23 {strides = array<i32>} : memref<1x8x128xf32, #tpu.memory_space<vmem>>, vector<1x8x128xf32>,
    } else {
    }
    return
  }
  func.func @transform_0(%arg0: i32, %arg1: i32) -> (i32, i32) {
    %c1_i32 = arith.constant 1 : i32
    %0 = arith.muli %arg0, %c1_i32 : i32
    %1 = arith.addi %0, %arg1 : i32
    %c0_i32 = arith.constant 0 : i32
    %2 = arith.minsi %1, %c0_i32 : i32
    %c0_i32_0 = arith.constant 0 : i32
    %c0_i32_1 = arith.constant 0 : i32
    return %2, %c0_i32_0 : i32, i32
  }
  func.func @transform_1(%arg0: i32, %arg1: i32) -> (i32, i32) {
    %c1_i32 = arith.constant 1 : i32
    %0 = arith.muli %arg0, %c1_i32 : i32
    %1 = arith.addi %0, %arg1 : i32
    %c0_i32 = arith.constant 0 : i32
    %2 = arith.minsi %1, %c0_i32 : i32
    %c0_i32_0 = arith.constant 0 : i32
    %c0_i32_1 = arith.constant 0 : i32
    return %2, %c0_i32_0 : i32, i32
  }
  func.func @transform_2(%arg0: i32, %arg1: i32) -> (i32, i32, i32) {
    %c0_i32 = arith.constant 0 : i32
    %c0_i32_0 = arith.constant 0 : i32
    %c0_i32_1 = arith.constant 0 : i32
    return %arg0, %c0_i32, %c0_i32_0 : i32, i32, i32
  }
}

</mosaic_0001>

<llo_original>
// kernel: tpu_custom_call.1
$region0: #{tpu_custom_call.1}
  #allocation0 [shape = 'u32[]', space=smem, size = 0x4, offset = 0x4, fixed_abs, tag = 'smem constant byte address 0x4 - core index']
  #allocation1 [shape = 'u32[144,128]{1,0:T(1,128)}', space=vmem, size = 0x12000, scoped, tag = 'internal scratch']
  %s0 = inlined_call_operand.vmem [shape: f32[8,16], index: 0, kind: input, shape index: {}]
  %s1 = inlined_call_operand.vmem [shape: s32[8,1], index: 1, kind: input, shape index: {}]
  %s2 = inlined_call_operand.hbm [shape: f32[1,8,128], index: 2, kind: output, shape index: {}]
  %s3 = sld [smem:[#allocation0]]
  $region26: #{tpu_custom_call.1} parent=0
    _
  %s5 = ssub.s32 1, %s3
  %s6 = scalar_select 0, %s5, %s3
  $region1: #{tpu_custom_call.1} parent=0
    #allocation2 [shape = 'u8[4096]{0}', space=vmem, size = 0x1000, scoped, tag = 'output window, operand 0, single buffered']
    #allocation3 [shape = 's32[1]{0}', space=sflag, size = 0x4, scoped, tag = 'scoped memory for tpu_custom_call.1']
    %7 = vsyncpa [#allocation3], 0
    // Predicated region
    $region2: #{tpu_custom_call.1} parent=1 // pred_check
      _
    $region3: #{tpu_custom_call.1} parent=1 // pred_check_branch
      %9 = sbr.rel (0) target = $region5
    $region4: #{tpu_custom_call.1} parent=1 // pred_region
      %s10 = sadd.s32 0, 0
      %p11 = scmp.lt.s32.totalorder %s10, 0
      %s12 = scalar_select %p11, %s10, 0
      %p13 = scmp.lt.s32.totalorder %s12, 0
      %s14 = scalar_select %p13, %s12, 0
      %s15 = smul.addr %s14, 8
      %s16 = scalar_lea.vmem %s0, %s15
      %s17 = sadd.s32 0, 0
      %p18 = scmp.lt.s32.totalorder %s17, 0
      %s19 = scalar_select %p18, %s17, 0
    $region5: #{tpu_custom_call.1} parent=1 // pred_fallthru
      _
    // Predicated region
    $region6: #{tpu_custom_call.1} parent=1 // pred_check
      _
    $region7: #{tpu_custom_call.1} parent=1 // pred_check_branch
      %21 = sbr.rel (0) target = $region9
    $region8: #{tpu_custom_call.1} parent=1 // pred_region
      %s22 = sadd.s32 0, 0
      %p23 = scmp.lt.s32.totalorder %s22, 0
      %s24 = scalar_select %p23, %s22, 0
      %p25 = scmp.lt.s32.totalorder %s24, 0
      %s26 = scalar_select %p25, %s24, 0
      %s27 = smul.addr %s26, 8
      %s28 = scalar_lea.vmem %s1, %s27
      %s29 = sadd.s32 0, 0
      %p30 = scmp.lt.s32.totalorder %s29, 0
      %s31 = scalar_select %p30, %s29, 0
    $region9: #{tpu_custom_call.1} parent=1 // pred_fallthru
      _
    %s32 = sadd.s32 0, 0
    %p33 = scmp.lt.s32.totalorder %s32, 0
    %s34 = scalar_select %p33, %s32, 0
    %p35 = scmp.lt.s32.totalorder %s34, 0
    %s36 = scalar_select %p35, %s34, 0
    %s37 = smul.addr %s36, 8
    %s38 = scalar_lea.vmem %s0, %s37
    %s39 = sadd.s32 0, 0
    %p40 = scmp.lt.s32.totalorder %s39, 0
    %s41 = scalar_select %p40, %s39, 0
    %p42 = scmp.lt.s32.totalorder %s41, 0
    %s43 = scalar_select %p42, %s41, 0
    %s44 = smul.addr %s43, 8
    %s45 = scalar_lea.vmem %s1, %s44
    %s46 = sadd.s32 0, 0
    %p47 = scmp.lt.s32.totalorder %s46, 0
    %s48 = scalar_select %p47, %s46, 0
    %p49 = scmp.lt.s32.totalorder %s48, 0
    %s50 = scalar_select %p49, %s48, 0
    %s51 = smul.addr %s50, 8
    %s52 = scalar_lea.vmem %s0, %s51
    %s53 = sadd.s32 0, 0
    %p54 = scmp.lt.s32.totalorder %s53, 0
    %s55 = scalar_select %p54, %s53, 0
    %s56 = sadd.s32 0, 0
    %p57 = scmp.lt.s32.totalorder %s56, 0
    %s58 = scalar_select %p57, %s56, 0
    %p59 = scmp.lt.s32.totalorder %s58, 0
    %s60 = scalar_select %p59, %s58, 0
    %s61 = smul.addr %s60, 8
    %s62 = scalar_lea.vmem %s1, %s61
    %s63 = sadd.s32 0, 0
    %p64 = scmp.lt.s32.totalorder %s63, 0
    %s65 = scalar_select %p64, %s63, 0
    %p66 = scmp.eq.s32.totalorder 0, 0
    // Predicated region
    $region10: #{tpu_custom_call.1} parent=1 // pred_check
      %p67 = pneg %p66
    $region11: #{tpu_custom_call.1} parent=1 // pred_check_branch
      %69 = sbr.rel (%p67) target = $region13
    $region12: #{tpu_custom_call.1} parent=1 // pred_region
      %70 = vst [vmem:[#allocation2] sm:$0xff] 0.0
    $region13: #{tpu_custom_call.1} parent=1 // pred_fallthru
      _
    %v71 = vld [vmem:[%s52] sm:$0xff]
    %v72 = vld [vmem:[%s62] sm:$0xff]
    %v73 = vlaneseq
    %v74 = vand.u32 %v73, 127
    %75 = vset.pattern.permute.xlu0 0
    %76 = vperm.xlu0 %75, %v72
    %v77 = vpop.permute.xlu0 %76
    %vm78 = vcmp.eq.s32.totalorder %v74, %v77
    %v79 = vsel %vm78, %v71, 0.0
    %v80 = vld [vmem:[#allocation2] sm:$0xff]
    %vm81 = vcmask 130048
    %v82 = vsel %vm81, %v79, 0.0
    %83 = vadd.xlane.f32.xlu0 %v82
    %v84 = vpop.xlane.xlu0 %83
    %v85 = vrot.slane %v84, 4
    %v86 = vadd.f32 %v84, %v85
    %v87 = vrot.slane %v86, 2
    %v88 = vadd.f32 %v86, %v87
    %v89 = vrot.slane %v88, 1
    %v90 = vadd.f32 %v88, %v89
    %s91 = vtos %v90
    %v92 = vstv %s91
    %v93 = vadd.f32 %v80, %v92
    %94 = vst [vmem:[#allocation2] sm:$0xff] %v93
    // Predicated region
    $region14: #{tpu_custom_call.1} parent=1 // pred_check
      %p95 = pneg %p66
    $region15: #{tpu_custom_call.1} parent=1 // pred_check_branch
      %97 = sbr.rel (%p95) target = $region17
    $region16: #{tpu_custom_call.1} parent=1 // pred_region
      %v98 = vld [vmem:[#allocation2] sm:$0xff]
      %v99 = vmul.f32 %v98, -0.125
      %100 = vst [vmem:[#allocation2] sm:$0xff] %v99
    $region17: #{tpu_custom_call.1} parent=1 // pred_fallthru
      _
    // Predicated region
    $region18: #{tpu_custom_call.1} parent=1 // pred_check
      _
    $region19: #{tpu_custom_call.1} parent=1 // pred_check_branch
      %102 = sbr.rel (0) target = $region21
    $region20: #{tpu_custom_call.1} parent=1 // pred_region
      %s104 = ssub.s32 128, 128
      %105 = vsyncadd [#allocation3], %s104
      %s107 = sshll.u32 [#allocation2], 4
      %s108 = int_to_ptr.vmem [resolvable:$true] %s107
      %110 = dma.vmem_to_hbm [thread:$0]  %s108, 128, %s2, [#allocation3]
    $region21: #{tpu_custom_call.1} parent=1 // pred_fallthru
      _
    // Predicated region
    $region22: #{tpu_custom_call.1} parent=1 // pred_check
      _
    $region23: #{tpu_custom_call.1} parent=1 // pred_check_branch
      %112 = sbr.rel (0) target = $region25
    $region24: #{tpu_custom_call.1} parent=1 // pred_region
      %113 = dma.done [#allocation3], 128
    $region25: #{tpu_custom_call.1} parent=1 // pred_fallthru
      _
    %114 = vsyncpa [#allocation3], 1

</llo_original>
